<compile_context>
chip_gen: v6e
topology: v6e:2x2x1
jax: 0.10.0
libtpu: 0.0.40
codegen_flags: <defaults>
</compile_context>

<pallas_src>
import functools

import jax
import jax.numpy as jnp
from jax.experimental import pallas as pl
from jax.experimental.pallas import tpu as pltpu

_MIB = 1 << 20


def _round_up(n, m):
    return ((n + m - 1) // m) * m


def _vmem_capacity_bytes():
    """Physical VMEM per TensorCore; conservative 64 MiB fallback if unqueryable."""
    try:
        return int(pltpu.get_tpu_info().vmem_capacity_bytes)
    except Exception:
        return 64 * _MIB


def _step_vmem_bytes(bb, T, D):
    """Approximate per-grid-step VMEM footprint (bytes), incl. pipeline buffers."""
    f32, bf16 = 4, 2
    x_io = 2 * bb * T * D * f32                     # x input, double-buffered
    w_io = D * 3 * D * bf16 + 3 * D * f32           # fused weights (bf16) + bias, single-buffered
    out_io = 2 * bb * 2 * D * f32                   # output, double-buffered
    interm = (bb * T * 3 * D * (f32 + bf16)         # qkv f32 + bf16 q/k/v copies
              + bb * T * D * (f32 + bf16)           # weighted f32 + x bf16 copy
              + bb * T * T * (2 * f32 + bf16))      # scores + exp (f32) + exp (bf16)
    # 1.25x headroom for Mosaic internal scratch / relayout copies.
    return int((x_io + w_io + out_io + interm) * 1.25)


def _pick_block_b(B, T, D, budget_bytes):
    """Batch block: multiple of 8 (or == B) for dense stores, fits VMEM, >=2 grid steps."""
    def aligned(c):
        return B % c == 0 and (c % 8 == 0 or c == B)

    cands = [c for c in range(1, B + 1) if aligned(c)]
    fitting = [c for c in cands if _step_vmem_bytes(c, T, D) <= budget_bytes]
    if not fitting:
        # Smallest aligned block; vmem_limit_bytes is raised accordingly by the caller.
        return min(cands)
    multi_step = [c for c in fitting if B // c >= 2]
    if multi_step:
        # Largest block that still leaves >=2 steps (pipelined x DMA + megacore sharding).
        return max(multi_step)
    return max(fitting)


def _attstats_kernel(x_ref, wqkv_ref, bqkv_ref, o_ref, *, T, D):
    bb = x_ref.shape[0]
    x = x_ref[...]                                        # (bb, T, D) f32 (kept for variance)

    # Fused q/k/v projection: one bf16 MXU matmul over all bb*T rows, f32 accumulation.
    x2d_bf = x.reshape(bb * T, D).astype(jnp.bfloat16)
    qkv = (jnp.dot(x2d_bf, wqkv_ref[...], preferred_element_type=jnp.float32)
           + bqkv_ref[...])                               # (bb*T, 3D) f32; q-scale pre-folded
    qkv = qkv.reshape(bb, T, 3 * D)
    q = qkv[:, :, :D].astype(jnp.bfloat16)                # lane-aligned slices (D % 128 == 0)
    k = qkv[:, :, D:2 * D].astype(jnp.bfloat16)
    v = qkv[:, :, 2 * D:].astype(jnp.bfloat16)

    # Scores: batched einsum contracting the LAST axis of both q and k (no transpose),
    # bf16 MXU inputs, f32 accumulation.
    scores = jnp.einsum("btd,bsd->bts", q, k,
                        preferred_element_type=jnp.float32)           # (bb, T, T)
    scores = scores - jnp.max(scores, axis=-1, keepdims=True)
    e = jnp.exp(scores)                                   # f32 exp (v5e EUP has no bf16)
    denom = jnp.sum(e, axis=-1, keepdims=True)            # (bb, T, 1)

    # Deferred softmax normalization: un-normalized PV matmul, then a single (bb,T,1)
    # reciprocal broadcast over D (EUP vrcp -- off the critical slot).
    weighted = jnp.einsum("bts,bsd->btd", e.astype(jnp.bfloat16), v,
                          preferred_element_type=jnp.float32)         # (bb, T, D)
    weighted = weighted * pl.reciprocal(denom, approx=True)

    # Stats pooling (matches PyTorch module: variance = sum_t(x*weighted) - mean^2).
    mean = jnp.sum(weighted, axis=1) * (1.0 / T)          # (bb, D)
    variance = jnp.sum(x * weighted, axis=1) - mean * mean

    # Single lane-dense store of the full (bb, 2D) output block (2D % 128 == 0).
    o_ref[...] = jnp.concatenate([mean, variance], axis=-1)


def _build_call(B, T, Dp, block_b, vmem_limit, cost, single_buffer_weights):
    kernel = functools.partial(_attstats_kernel, T=T, D=Dp)
    w_kwargs = dict(pipeline_mode=pl.Buffered(1)) if single_buffer_weights else {}
    return pl.pallas_call(
        kernel,
        out_shape=jax.ShapeDtypeStruct((B, 2 * Dp), jnp.float32),
        grid_spec=pltpu.PrefetchScalarGridSpec(
            num_scalar_prefetch=0,
            grid=(B // block_b,),
            in_specs=[
                pl.BlockSpec((block_b, T, Dp), lambda b: (b, 0, 0)),          # x (f32)
                pl.BlockSpec((Dp, 3 * Dp), lambda b: (0, 0), **w_kwargs),     # fused W_qkv (bf16)
                pl.BlockSpec((1, 3 * Dp), lambda b: (0, 0), **w_kwargs),      # fused b_qkv (f32)
            ],
            out_specs=pl.BlockSpec((block_b, 2 * Dp), lambda b: (b, 0)),
        ),
        compiler_params=pltpu.CompilerParams(
            dimension_semantics=("parallel",),
            vmem_limit_bytes=vmem_limit),
        cost_estimate=cost,
    )


def att_stats_pool(x, wq_t, bq, wk_t, bk, wv_t, bv, *, block_b=None):
    """x: (B, T, D) f32. w*_t: (D, D) pre-transposed linear weights. b*: (1, D)."""
    B, T, D = x.shape
    scaling = float(D) ** (-0.5)

    # Pad D to a lane-tile multiple so in-kernel slices / concat / stores stay
    # 128-aligned. Zero-padded lanes produce zeros everywhere and are sliced off below.
    Dp = _round_up(max(D, 1), 128)

    def pad_w(w):
        return jnp.pad(w, ((0, Dp - D), (0, Dp - D)))

    def pad_b(b):
        return jnp.pad(b, ((0, 0), (0, Dp - D)))

    # One-time packing outside the kernel: fold 1/sqrt(D) into the q weights/bias,
    # fuse q/k/v into one (Dp, 3*Dp) projection, cast weights to bf16 for the MXU.
    wqkv = jnp.concatenate([pad_w(wq_t * scaling), pad_w(wk_t), pad_w(wv_t)], axis=1)
    bqkv = jnp.concatenate([pad_b(bq * scaling), pad_b(bk), pad_b(bv)], axis=1)
    wqkv_bf = wqkv.astype(jnp.bfloat16)
    bqkv = bqkv.astype(jnp.float32)
    x_p = x if Dp == D else jnp.pad(x, ((0, 0), (0, 0), (0, Dp - D)))

    vmem_cap = _vmem_capacity_bytes()
    budget = min(32 * _MIB, vmem_cap // 4)          # ~32 MiB on v5e/v6e, ~16 MiB on v7x
    if block_b is None:
        block_b = _pick_block_b(B, T, Dp, budget)
    assert B % block_b == 0, (B, block_b)

    fp = _step_vmem_bytes(block_b, T, Dp)
    vmem_limit = None
    if fp > 12 * _MIB:
        cap = min(int(vmem_cap * 0.75), 96 * _MIB)  # ~48 MiB cap on v7x, 96 MiB on v5e/v6e
        vmem_limit = min(max(2 * fp, 32 * _MIB), cap)

    flops = (2 * B * T * Dp * 3 * Dp       # fused projection
             + 4 * B * T * T * Dp          # QK^T + PV
             + 6 * B * T * Dp)             # stats pooling
    cost = pl.CostEstimate(
        flops=int(flops),
        transcendentals=int(B * T * T + B * T),
        bytes_accessed=int(4 * B * T * Dp + 2 * Dp * 3 * Dp + 4 * 3 * Dp + 4 * B * 2 * Dp))

    args = (x_p, wqkv_bf, bqkv)
    try:
        out = _build_call(B, T, Dp, block_b, vmem_limit, cost,
                          single_buffer_weights=True)(*args)
    except Exception:
        # Fallback for JAX versions without pipeline_mode=pl.Buffered(1) support:
        # identical kernel, default (double-buffered) weight specs.
        out = _build_call(B, T, Dp, block_b, vmem_limit, cost,
                          single_buffer_weights=False)(*args)

    if Dp != D:
        out = jnp.concatenate([out[:, :D], out[:, Dp:Dp + D]], axis=1)
    return out


def _reference(x, wq_t, bq, wk_t, bk, wv_t, bv):
    D = x.shape[-1]
    scaling = float(D) ** (-0.5)
    q = (x @ wq_t + bq) * scaling
    k = x @ wk_t + bk
    v = x @ wv_t + bv
    attn = jax.nn.softmax(jnp.einsum("btd,bsd->bts", q, k), axis=-1)
    weighted = jnp.einsum("bts,bsd->btd", attn, v)
    mean = jnp.mean(weighted, axis=1)
    variance = jnp.sum(x * weighted, axis=1) - mean * mean
    return jnp.concatenate([mean, variance], axis=1)


if __name__ == "__main__":
    B, T, D = 2, 8, 32  # small shapes: batch=2, time=8, hidden=32

    key = jax.random.PRNGKey(0)
    kx, kq, kk, kv, kbq, kbk, kbv = jax.random.split(key, 7)

    x = jax.random.normal(kx, (B, T, D), dtype=jnp.float32)

    # nn.Linear weights are (out, in); pre-transpose so the math is x @ W_t + b.
    scale = D ** -0.5
    wq = jax.random.uniform(kq, (D, D), jnp.float32, -scale, scale)
    wk = jax.random.uniform(kk, (D, D), jnp.float32, -scale, scale)
    wv = jax.random.uniform(kv, (D, D), jnp.float32, -scale, scale)
    bq = jax.random.uniform(kbq, (1, D), jnp.float32, -scale, scale)
    bk = jax.random.uniform(kbk, (1, D), jnp.float32, -scale, scale)
    bv = jax.random.uniform(kbv, (1, D), jnp.float32, -scale, scale)

    out = att_stats_pool(x, wq.T, bq, wk.T, bk, wv.T, bv)
    out = jax.block_until_ready(out)

    ref = _reference(x, wq.T, bq, wk.T, bk, wv.T, bv)
    assert out.shape == (B, 2 * D), out.shape
    # Tolerance accounts for bf16 MXU operands (f32 accumulation) and the approximate
    # EUP reciprocal in the softmax normalization; with f32 matmuls it matches ~1e-5.
    max_diff = float(jnp.max(jnp.abs(out - ref)))
    assert jnp.allclose(out, ref, atol=1e-1, rtol=1e-1), max_diff

    print("KERNEL_OK")
</pallas_src>

<mosaic_0001>
module attributes {stable_mosaic.version = 11 : i64} {
  func.func @_attstats_kernel(%arg0: i32, %arg1: memref<2x8x128xf32, #tpu.memory_space<vmem>>, %arg2: memref<128x384xbf16, #tpu.memory_space<vmem>>, %arg3: memref<1x384xf32, #tpu.memory_space<vmem>>, %arg4: memref<2x256xf32, #tpu.memory_space<vmem>>) attributes {dimension_semantics = [#tpu.dimension_semantics<parallel>], iteration_bounds = array<i64: 1>, scalar_prefetch = 0 : i64, scratch_operands = 0 : i64, tpu.core_type = #tpu.core_type<tc>, window_params = [{transform_indices = @transform_0, window_bounds = array<i64: 2, 8, 128>}, {pipeline_mode = #tpu.pipeline_mode<synchronous>, transform_indices = @transform_1, window_bounds = array<i64: 128, 384>}, {pipeline_mode = #tpu.pipeline_mode<synchronous>, transform_indices = @transform_2, window_bounds = array<i64: 1, 384>}, {transform_indices = @transform_3, window_bounds = array<i64: 2, 256>}]} {
    %c0 = arith.constant 0 : index
    %c0_0 = arith.constant 0 : index
    %c0_1 = arith.constant 0 : index
    %0 = vector.load %arg1[%c0, %c0_0, %c0_1] : memref<2x8x128xf32, #tpu.memory_space<vmem>>, vector<2x8x128xf32>
    %1 = vector.shape_cast %0 : vector<2x8x128xf32> to vector<16x128xf32>
    %2 = arith.truncf %1 : vector<16x128xf32> to vector<16x128xbf16>
    %c0_2 = arith.constant 0 : index
    %c0_3 = arith.constant 0 : index
    %3 = vector.load %arg2[%c0_2, %c0_3] : memref<128x384xbf16, #tpu.memory_space<vmem>>, vector<128x384xbf16>
    %cst = arith.constant dense<0.000000e+00> : vector<16x384xf32>
    %4 = tpu.matmul %2, %3, %cst {dimension_numbers = #tpu.dot_dimension_numbers<[1], [0], [0], [1], [0, 0, 1, 1], [], []>} : vector<16x128xbf16>, vector<128x384xbf16>, vector<16x384xf32> -> vector<16x384xf32>
    %c0_4 = arith.constant 0 : index
    %c0_5 = arith.constant 0 : index
    %5 = vector.load %arg3[%c0_4, %c0_5] : memref<1x384xf32, #tpu.memory_space<vmem>>, vector<1x384xf32>
    %6 = vector.broadcast %5 : vector<1x384xf32> to vector<16x384xf32>
    %7 = arith.addf %4, %6 : vector<16x384xf32>
    %8 = vector.shape_cast %7 : vector<16x384xf32> to vector<2x8x384xf32>
    %9 = vector.extract_strided_slice %8 {offsets = [0, 0, 0], sizes = [2, 8, 128], strides = [1, 1, 1]} : vector<2x8x384xf32> to vector<2x8x128xf32>
    %10 = arith.truncf %9 : vector<2x8x128xf32> to vector<2x8x128xbf16>
    %11 = vector.extract_strided_slice %8 {offsets = [0, 0, 128], sizes = [2, 8, 128], strides = [1, 1, 1]} : vector<2x8x384xf32> to vector<2x8x128xf32>
    %12 = arith.truncf %11 : vector<2x8x128xf32> to vector<2x8x128xbf16>
    %13 = vector.extract_strided_slice %8 {offsets = [0, 0, 256], sizes = [2, 8, 128], strides = [1, 1, 1]} : vector<2x8x384xf32> to vector<2x8x128xf32>
    %14 = arith.truncf %13 : vector<2x8x128xf32> to vector<2x8x128xbf16>
    "tpu.trace_start"() <{level = 10 : i32, message = "btd,bsd->bts"}> : () -> ()
    %cst_6 = arith.constant dense<0.000000e+00> : vector<2x8x8xf32>
    %15 = tpu.matmul %10, %12, %cst_6 {dimension_numbers = #tpu.dot_dimension_numbers<[2], [2], [1], [1], [0, 0, 0, 1, 1, 1], [0], [0]>} : vector<2x8x128xbf16>, vector<2x8x128xbf16>, vector<2x8x8xf32> -> vector<2x8x8xf32>
    "tpu.trace_stop"() : () -> ()
    %cst_7 = arith.constant dense<0xFF800000> : vector<2x8xf32>
    %16 = vector.multi_reduction <maximumf>, %15, %cst_7 [2] : vector<2x8x8xf32> to vector<2x8xf32>
    %17 = vector.shape_cast %16 : vector<2x8xf32> to vector<2x8x1xf32>
    %18 = vector.broadcast %17 : vector<2x8x1xf32> to vector<2x8x8xf32>
    %19 = arith.subf %15, %18 : vector<2x8x8xf32>
    %20 = math.exp %19 : vector<2x8x8xf32>
    %cst_8 = arith.constant dense<0.000000e+00> : vector<2x8xf32>
    %21 = vector.multi_reduction <add>, %20, %cst_8 [2] : vector<2x8x8xf32> to vector<2x8xf32>
    %22 = vector.shape_cast %21 : vector<2x8xf32> to vector<2x8x1xf32>
    %23 = arith.truncf %20 : vector<2x8x8xf32> to vector<2x8x8xbf16>
    "tpu.trace_start"() <{level = 10 : i32, message = "bts,bsd->btd"}> : () -> ()
    %cst_9 = arith.constant dense<0.000000e+00> : vector<2x8x128xf32>
    %24 = tpu.matmul %23, %14, %cst_9 {dimension_numbers = #tpu.dot_dimension_numbers<[2], [1], [1], [2], [0, 0, 0, 1, 1, 2], [0], [0]>} : vector<2x8x8xbf16>, vector<2x8x128xbf16>, vector<2x8x128xf32> -> vector<2x8x128xf32>
    "tpu.trace_stop"() : () -> ()
    %25 = tpu.reciprocal %22 {approx = true} : vector<2x8x1xf32> -> vector<2x8x1xf32>
    %26 = vector.broadcast %25 : vector<2x8x1xf32> to vector<2x8x128xf32>
    %27 = arith.mulf %24, %26 : vector<2x8x128xf32>
    %cst_10 = arith.constant dense<0.000000e+00> : vector<2x128xf32>
    %28 = vector.multi_reduction <add>, %27, %cst_10 [1] : vector<2x8x128xf32> to vector<2x128xf32>
    %cst_11 = arith.constant 1.250000e-01 : f32
    %29 = vector.broadcast %cst_11 : f32 to vector<2x128xf32>
    %30 = arith.mulf %28, %29 : vector<2x128xf32>
    %31 = arith.mulf %0, %27 : vector<2x8x128xf32>
    %cst_12 = arith.constant dense<0.000000e+00> : vector<2x128xf32>
    %32 = vector.multi_reduction <add>, %31, %cst_12 [1] : vector<2x8x128xf32> to vector<2x128xf32>
    %33 = arith.mulf %30, %30 : vector<2x128xf32>
    %34 = arith.subf %32, %33 : vector<2x128xf32>
    %35 = tpu.concatenate %30, %34 in 1 : vector<2x128xf32>, vector<2x128xf32> -> vector<2x256xf32>
    %c0_13 = arith.constant 0 : index
    %c0_14 = arith.constant 0 : index
    %36 = vector.load %arg4[%c0_13, %c0_14] : memref<2x256xf32, #tpu.memory_space<vmem>>, vector<2x256xf32>
    tpu.vector_store %arg4[%c0_13, %c0_14], %35 {strides = array<i32>} : memref<2x256xf32, #tpu.memory_space<vmem>>, vector<2x256xf32>,
    return
  }
  func.func @transform_0(%arg0: i32) -> (i32, i32, i32) {
    %c0_i32 = arith.constant 0 : i32
    %c0_i32_0 = arith.constant 0 : i32
    %c0_i32_1 = arith.constant 0 : i32
    return %arg0, %c0_i32, %c0_i32_0 : i32, i32, i32
  }
  func.func @transform_1(%arg0: i32) -> (i32, i32) {
    %c0_i32 = arith.constant 0 : i32
    %c0_i32_0 = arith.constant 0 : i32
    %c0_i32_1 = arith.constant 0 : i32
    return %c0_i32, %c0_i32_0 : i32, i32
  }
  func.func @transform_2(%arg0: i32) -> (i32, i32) {
    %c0_i32 = arith.constant 0 : i32
    %c0_i32_0 = arith.constant 0 : i32
    %c0_i32_1 = arith.constant 0 : i32
    return %c0_i32, %c0_i32_0 : i32, i32
  }
  func.func @transform_3(%arg0: i32) -> (i32, i32) {
    %c0_i32 = arith.constant 0 : i32
    %c0_i32_0 = arith.constant 0 : i32
    return %arg0, %c0_i32 : i32, i32
  }
}

module attributes {stable_mosaic.version = 11 : i64} {
  func.func @_attstats_kernel(%arg0: i32, %arg1: memref<2x8x128xf32, #tpu.memory_space<vmem>>, %arg2: memref<128x384xbf16, #tpu.memory_space<vmem>>, %arg3: memref<1x384xf32, #tpu.memory_space<vmem>>, %arg4: memref<2x256xf32, #tpu.memory_space<vmem>>) attributes {dimension_semantics = [#tpu.dimension_semantics<parallel>], iteration_bounds = array<i64: 1>, scalar_prefetch = 0 : i64, scratch_operands = 0 : i64, tpu.core_type = #tpu.core_type<tc>, window_params = [{transform_indices = @transform_0, window_bounds = array<i64: 2, 8, 128>}, {pipeline_mode = #tpu.pipeline_mode<synchronous>, transform_indices = @transform_1, window_bounds = array<i64: 128, 384>}, {pipeline_mode = #tpu.pipeline_mode<synchronous>, transform_indices = @transform_2, window_bounds = array<i64: 1, 384>}, {transform_indices = @transform_3, window_bounds = array<i64: 2, 256>}]} {
    %c0 = arith.constant 0 : index
    %c0_0 = arith.constant 0 : index
    %c0_1 = arith.constant 0 : index
    %0 = vector.load %arg1[%c0, %c0_0, %c0_1] : memref<2x8x128xf32, #tpu.memory_space<vmem>>, vector<2x8x128xf32>
    %1 = vector.shape_cast %0 : vector<2x8x128xf32> to vector<16x128xf32>
    %2 = arith.truncf %1 : vector<16x128xf32> to vector<16x128xbf16>
    %c0_2 = arith.constant 0 : index
    %c0_3 = arith.constant 0 : index
    %3 = vector.load %arg2[%c0_2, %c0_3] : memref<128x384xbf16, #tpu.memory_space<vmem>>, vector<128x384xbf16>
    %cst = arith.constant dense<0.000000e+00> : vector<16x384xf32>
    %4 = tpu.matmul %2, %3, %cst {dimension_numbers = #tpu.dot_dimension_numbers<[1], [0], [0], [1], [0, 0, 1, 1], [], []>} : vector<16x128xbf16>, vector<128x384xbf16>, vector<16x384xf32> -> vector<16x384xf32>
    %c0_4 = arith.constant 0 : index
    %c0_5 = arith.constant 0 : index
    %5 = vector.load %arg3[%c0_4, %c0_5] : memref<1x384xf32, #tpu.memory_space<vmem>>, vector<1x384xf32>
    %6 = vector.broadcast %5 : vector<1x384xf32> to vector<16x384xf32>
    %7 = arith.addf %4, %6 : vector<16x384xf32>
    %8 = vector.shape_cast %7 : vector<16x384xf32> to vector<2x8x384xf32>
    %9 = vector.extract_strided_slice %8 {offsets = [0, 0, 0], sizes = [2, 8, 128], strides = [1, 1, 1]} : vector<2x8x384xf32> to vector<2x8x128xf32>
    %10 = arith.truncf %9 : vector<2x8x128xf32> to vector<2x8x128xbf16>
    %11 = vector.extract_strided_slice %8 {offsets = [0, 0, 128], sizes = [2, 8, 128], strides = [1, 1, 1]} : vector<2x8x384xf32> to vector<2x8x128xf32>
    %12 = arith.truncf %11 : vector<2x8x128xf32> to vector<2x8x128xbf16>
    %13 = vector.extract_strided_slice %8 {offsets = [0, 0, 256], sizes = [2, 8, 128], strides = [1, 1, 1]} : vector<2x8x384xf32> to vector<2x8x128xf32>
    %14 = arith.truncf %13 : vector<2x8x128xf32> to vector<2x8x128xbf16>
    "tpu.trace_start"() <{level = 10 : i32, message = "btd,bsd->bts"}> : () -> ()
    %cst_6 = arith.constant dense<0.000000e+00> : vector<2x8x8xf32>
    %15 = tpu.matmul %10, %12, %cst_6 {dimension_numbers = #tpu.dot_dimension_numbers<[2], [2], [1], [1], [0, 0, 0, 1, 1, 1], [0], [0]>} : vector<2x8x128xbf16>, vector<2x8x128xbf16>, vector<2x8x8xf32> -> vector<2x8x8xf32>
    "tpu.trace_stop"() : () -> ()
    %cst_7 = arith.constant dense<0xFF800000> : vector<2x8xf32>
    %16 = vector.multi_reduction <maximumf>, %15, %cst_7 [2] : vector<2x8x8xf32> to vector<2x8xf32>
    %17 = vector.shape_cast %16 : vector<2x8xf32> to vector<2x8x1xf32>
    %18 = vector.broadcast %17 : vector<2x8x1xf32> to vector<2x8x8xf32>
    %19 = arith.subf %15, %18 : vector<2x8x8xf32>
    %20 = math.exp %19 : vector<2x8x8xf32>
    %cst_8 = arith.constant dense<0.000000e+00> : vector<2x8xf32>
    %21 = vector.multi_reduction <add>, %20, %cst_8 [2] : vector<2x8x8xf32> to vector<2x8xf32>
    %22 = vector.shape_cast %21 : vector<2x8xf32> to vector<2x8x1xf32>
    %23 = arith.truncf %20 : vector<2x8x8xf32> to vector<2x8x8xbf16>
    "tpu.trace_start"() <{level = 10 : i32, message = "bts,bsd->btd"}> : () -> ()
    %cst_9 = arith.constant dense<0.000000e+00> : vector<2x8x128xf32>
    %24 = tpu.matmul %23, %14, %cst_9 {dimension_numbers = #tpu.dot_dimension_numbers<[2], [1], [1], [2], [0, 0, 0, 1, 1, 2], [0], [0]>} : vector<2x8x8xbf16>, vector<2x8x128xbf16>, vector<2x8x128xf32> -> vector<2x8x128xf32>
    "tpu.trace_stop"() : () -> ()
    %25 = tpu.reciprocal %22 {approx = true} : vector<2x8x1xf32> -> vector<2x8x1xf32>
    %26 = vector.broadcast %25 : vector<2x8x1xf32> to vector<2x8x128xf32>
    %27 = arith.mulf %24, %26 : vector<2x8x128xf32>
    %cst_10 = arith.constant dense<0.000000e+00> : vector<2x128xf32>
    %28 = vector.multi_reduction <add>, %27, %cst_10 [1] : vector<2x8x128xf32> to vector<2x128xf32>
    %cst_11 = arith.constant 1.250000e-01 : f32
    %29 = vector.broadcast %cst_11 : f32 to vector<2x128xf32>
    %30 = arith.mulf %28, %29 : vector<2x128xf32>
    %31 = arith.mulf %0, %27 : vector<2x8x128xf32>
    %cst_12 = arith.constant dense<0.000000e+00> : vector<2x128xf32>
    %32 = vector.multi_reduction <add>, %31, %cst_12 [1] : vector<2x8x128xf32> to vector<2x128xf32>
    %33 = arith.mulf %30, %30 : vector<2x128xf32>
    %34 = arith.subf %32, %33 : vector<2x128xf32>
    %35 = tpu.concatenate %30, %34 in 1 : vector<2x128xf32>, vector<2x128xf32> -> vector<2x256xf32>
    %c0_13 = arith.constant 0 : index
    %c0_14 = arith.constant 0 : index
    %36 = vector.load %arg4[%c0_13, %c0_14] : memref<2x256xf32, #tpu.memory_space<vmem>>, vector<2x256xf32>
    tpu.vector_store %arg4[%c0_13, %c0_14], %35 {strides = array<i32>} : memref<2x256xf32, #tpu.memory_space<vmem>>, vector<2x256xf32>,
    return
  }
  func.func @transform_0(%arg0: i32) -> (i32, i32, i32) {
    %c0_i32 = arith.constant 0 : i32
    %c0_i32_0 = arith.constant 0 : i32
    %c0_i32_1 = arith.constant 0 : i32
    return %arg0, %c0_i32, %c0_i32_0 : i32, i32, i32
  }
  func.func @transform_1(%arg0: i32) -> (i32, i32) {
    %c0_i32 = arith.constant 0 : i32
    %c0_i32_0 = arith.constant 0 : i32
    %c0_i32_1 = arith.constant 0 : i32
    return %c0_i32, %c0_i32_0 : i32, i32
  }
  func.func @transform_2(%arg0: i32) -> (i32, i32) {
    %c0_i32 = arith.constant 0 : i32
    %c0_i32_0 = arith.constant 0 : i32
    %c0_i32_1 = arith.constant 0 : i32
    return %c0_i32, %c0_i32_0 : i32, i32
  }
  func.func @transform_3(%arg0: i32) -> (i32, i32) {
    %c0_i32 = arith.constant 0 : i32
    %c0_i32_0 = arith.constant 0 : i32
    return %arg0, %c0_i32 : i32, i32
  }
}

</mosaic_0001>

<llo_original>
// kernel: tpu_custom_call.1
$region0: #{tpu_custom_call.1}
  #allocation0 [shape = 'u32[]', space=smem, size = 0x4, offset = 0x4, fixed_abs, tag = 'smem constant byte address 0x4 - core index']
  #allocation1 [shape = 'u32[144,128]{1,0:T(1,128)}', space=vmem, size = 0x12000, scoped, tag = 'internal scratch']
  %s0 = inlined_call_operand.hbm [shape: f32[2,8,128], index: 0, kind: input, shape index: {}]
  %s1 = inlined_call_operand.hbm [shape: bf16[128,384], index: 1, kind: input, shape index: {}]
  %s2 = inlined_call_operand.vmem [shape: f32[1,384], index: 2, kind: input, shape index: {}]
  %s3 = inlined_call_operand.hbm [shape: f32[2,256], index: 3, kind: output, shape index: {}]
  %s4 = sld [smem:[#allocation0]]
  $region30: #{tpu_custom_call.1} parent=0
    _
  %s6 = ssub.s32 1, %s4
  %s7 = scalar_select 0, %s6, %s4
  $region1: #{tpu_custom_call.1} parent=0
    #allocation2 [shape = 'u8[8192]{0}', space=vmem, size = 0x2000, scoped, tag = 'input window, operand 0, single buffered']
    #allocation3 [shape = 's32[1]{0}', space=sflag, size = 0x4, scoped, tag = 'scoped memory for tpu_custom_call.1']
    #allocation4 [shape = 's32[1]{0}', space=sflag, size = 0x4, scoped, tag = 'scoped memory for tpu_custom_call.1']
    #allocation5 [shape = 'u8[98304]{0}', space=vmem, size = 0x18000, scoped, tag = 'input window, operand 1, single buffered']
    #allocation6 [shape = 's32[1]{0}', space=sflag, size = 0x4, scoped, tag = 'scoped memory for tpu_custom_call.1']
    #allocation7 [shape = 'u8[2048]{0}', space=vmem, size = 0x800, scoped, tag = 'output window, operand 0, single buffered']
    %8 = vsyncpa [#allocation3], 0
    %9 = vsyncpa [#allocation6], 0
    %10 = vsyncpa [#allocation4], 0
    // Predicated region
    $region2: #{tpu_custom_call.1} parent=1 // pred_check
      _
    $region3: #{tpu_custom_call.1} parent=1 // pred_check_branch
      %12 = sbr.rel (0) target = $region5
    $region4: #{tpu_custom_call.1} parent=1 // pred_region
      %s14 = ssub.s32 256, 256
      %15 = vsyncadd [#allocation3], %s14
      %s16 = sshll.u32 [#allocation2], 4
      %s17 = int_to_ptr.vmem [resolvable:$true] %s16
      %22 = dma.hbm_to_vmem [thread:$0]  %s0, 256, %s17, [#allocation3], 128, 128, 8
    $region5: #{tpu_custom_call.1} parent=1 // pred_fallthru
      _
    // Predicated region
    $region6: #{tpu_custom_call.1} parent=1 // pred_check
      _
    $region7: #{tpu_custom_call.1} parent=1 // pred_check_branch
      %24 = sbr.rel (0) target = $region9
    $region8: #{tpu_custom_call.1} parent=1 // pred_region
      %s26 = ssub.s32 3072, 3072
      %27 = vsyncadd [#allocation6], %s26
      %s28 = sshll.u32 [#allocation5], 4
      %s29 = int_to_ptr.vmem [resolvable:$true] %s28
      %34 = dma.hbm_to_vmem [thread:$0]  %s1, 3072, %s29, [#allocation6], 192, 192, 12
    $region9: #{tpu_custom_call.1} parent=1 // pred_fallthru
      _
    // Predicated region
    $region10: #{tpu_custom_call.1} parent=1 // pred_check
      _
    $region11: #{tpu_custom_call.1} parent=1 // pred_check_branch
      %36 = sbr.rel (0) target = $region13
    $region12: #{tpu_custom_call.1} parent=1 // pred_region
      _
    $region13: #{tpu_custom_call.1} parent=1 // pred_fallthru
      _
    // Predicated region
    $region14: #{tpu_custom_call.1} parent=1 // pred_check
      _
    $region15: #{tpu_custom_call.1} parent=1 // pred_check_branch
      %38 = sbr.rel (0) target = $region17
    $region16: #{tpu_custom_call.1} parent=1 // pred_region
      %39 = dma.done [#allocation3], 256
    $region17: #{tpu_custom_call.1} parent=1 // pred_fallthru
      _
    // Predicated region
    $region18: #{tpu_custom_call.1} parent=1 // pred_check
      _
    $region19: #{tpu_custom_call.1} parent=1 // pred_check_branch
      %41 = sbr.rel (0) target = $region21
    $region20: #{tpu_custom_call.1} parent=1 // pred_region
      %42 = dma.done [#allocation6], 3072
    $region21: #{tpu_custom_call.1} parent=1 // pred_fallthru
      _
    %v44 = vld [vmem:[#allocation2] sm:$0xff]
    %v45 = vld [vmem:[#allocation2 + $0x8] sm:$0xff]
    %v46 = vpack.c.bf16 %v45, %v44
    %v47 = vld [vmem:[#allocation5] sm:$0xff]
    %v48 = vld [vmem:[#allocation5 + $0x8] sm:$0xf]
    %v49 = vld [vmem:[#allocation5 + $0xc] sm:$0xff]
    %v50 = vld [vmem:[#allocation5 + $0x14] sm:$0xf]
    %v51 = vld [vmem:[#allocation5 + $0x18] sm:$0xff]
    %v52 = vld [vmem:[#allocation5 + $0x20] sm:$0xf]
    %v53 = vld [vmem:[#allocation5 + $0x24] sm:$0xff]
    %v54 = vld [vmem:[#allocation5 + $0x2c] sm:$0xf]
    %v55 = vld [vmem:[#allocation5 + $0x30] sm:$0xff]
    %v56 = vld [vmem:[#allocation5 + $0x38] sm:$0xf]
    %v57 = vld [vmem:[#allocation5 + $0x3c] sm:$0xff]
    %v58 = vld [vmem:[#allocation5 + $0x44] sm:$0xf]
    %v59 = vld [vmem:[#allocation5 + $0x48] sm:$0xff]
    %v60 = vld [vmem:[#allocation5 + $0x50] sm:$0xf]
    %v61 = vld [vmem:[#allocation5 + $0x54] sm:$0xff]
    %v62 = vld [vmem:[#allocation5 + $0x5c] sm:$0xf]
    %v63 = vld [vmem:[#allocation5 + $0x60] sm:$0xff]
    %v64 = vld [vmem:[#allocation5 + $0x68] sm:$0xf]
    %v65 = vld [vmem:[#allocation5 + $0x6c] sm:$0xff]
    %v66 = vld [vmem:[#allocation5 + $0x74] sm:$0xf]
    %v67 = vld [vmem:[#allocation5 + $0x78] sm:$0xff]
    %v68 = vld [vmem:[#allocation5 + $0x80] sm:$0xf]
    %v69 = vld [vmem:[#allocation5 + $0x84] sm:$0xff]
    %v70 = vld [vmem:[#allocation5 + $0x8c] sm:$0xf]
    %v71 = vld [vmem:[#allocation5 + $0x90] sm:$0xff]
    %v72 = vld [vmem:[#allocation5 + $0x98] sm:$0xf]
    %v73 = vld [vmem:[#allocation5 + $0x9c] sm:$0xff]
    %v74 = vld [vmem:[#allocation5 + $0xa4] sm:$0xf]
    %v75 = vld [vmem:[#allocation5 + $0xa8] sm:$0xff]
    %v76 = vld [vmem:[#allocation5 + $0xb0] sm:$0xf]
    %v77 = vld [vmem:[#allocation5 + $0xb4] sm:$0xff]
    %v78 = vld [vmem:[#allocation5 + $0xbc] sm:$0xf]
    %v79 = vld [vmem:[%s2] sm:$0x7]
    %v81 = vlaneseq
    %v82 = vshrl.u32 %v81, 7
    %v83 = vsub.s32 0, %v82
    %v84 = vrot.slane %v79, %v83
    %v85 = vlaneseq
    %v86 = vshrl.u32 %v85, 7
    %v87 = vsub.s32 1, %v86
    %v88 = vrot.slane %v79, %v87
    %v89 = vlaneseq
    %v90 = vshrl.u32 %v89, 7
    %v91 = vsub.s32 2, %v90
    %v92 = vrot.slane %v79, %v91
    %v128 = vunpack.c.l.b16 %v47
    %v129 = vunpack.c.h.b16 %v47
    %v130 = vunpack.c.l.b16 %v48
    %v131 = vunpack.c.l.b16 %v49
    %v132 = vunpack.c.h.b16 %v49
    %v133 = vunpack.c.l.b16 %v50
    %v134 = vunpack.c.l.b16 %v51
    %v135 = vunpack.c.h.b16 %v51
    %v136 = vunpack.c.l.b16 %v52
    %v137 = vunpack.c.l.b16 %v53
    %v138 = vunpack.c.h.b16 %v53
    %v139 = vunpack.c.l.b16 %v54
    %v140 = vunpack.c.l.b16 %v55
    %v141 = vunpack.c.h.b16 %v55
    %v142 = vunpack.c.l.b16 %v56
    %v143 = vunpack.c.l.b16 %v57
    %v144 = vunpack.c.h.b16 %v57
    %v145 = vunpack.c.l.b16 %v58
    %v146 = vunpack.c.l.b16 %v59
    %v147 = vunpack.c.h.b16 %v59
    %v148 = vunpack.c.l.b16 %v60
    %v149 = vunpack.c.l.b16 %v61
    %v150 = vunpack.c.h.b16 %v61
    %v151 = vunpack.c.l.b16 %v62
    %v152 = vunpack.c.l.b16 %v63
    %v153 = vunpack.c.h.b16 %v63
    %v154 = vunpack.c.l.b16 %v64
    %v155 = vunpack.c.l.b16 %v65
    %v156 = vunpack.c.h.b16 %v65
    %v157 = vunpack.c.l.b16 %v66
    %v158 = vunpack.c.l.b16 %v67
    %v159 = vunpack.c.h.b16 %v67
    %v160 = vunpack.c.l.b16 %v68
    %v161 = vunpack.c.l.b16 %v69
    %v162 = vunpack.c.h.b16 %v69
    %v163 = vunpack.c.l.b16 %v70
    %v164 = vunpack.c.l.b16 %v71
    %v165 = vunpack.c.h.b16 %v71
    %v166 = vunpack.c.l.b16 %v72
    %v167 = vunpack.c.l.b16 %v73
    %v168 = vunpack.c.h.b16 %v73
    %v169 = vunpack.c.l.b16 %v74
    %v170 = vunpack.c.l.b16 %v75
    %v171 = vunpack.c.h.b16 %v75
    %v172 = vunpack.c.l.b16 %v76
    %v173 = vunpack.c.l.b16 %v77
    %v174 = vunpack.c.h.b16 %v77
    %v175 = vunpack.c.l.b16 %v78
    %v176 = vpack.c.b16 %v131, %v128
    %v177 = vpack.c.b16 %v132, %v129
    %v178 = vpack.c.b16 %v133, %v130
    %v179 = vpack.c.b16 %v137, %v134
    %v180 = vpack.c.b16 %v138, %v135
    %v181 = vpack.c.b16 %v139, %v136
    %v182 = vpack.c.b16 %v143, %v140
    %v183 = vpack.c.b16 %v144, %v141
    %v184 = vpack.c.b16 %v145, %v142
    %v185 = vpack.c.b16 %v149, %v146
    %v186 = vpack.c.b16 %v150, %v147
    %v187 = vpack.c.b16 %v151, %v148
    %v188 = vpack.c.b16 %v155, %v152
    %v189 = vpack.c.b16 %v156, %v153
    %v190 = vpack.c.b16 %v157, %v154
    %v191 = vpack.c.b16 %v161, %v158
    %v192 = vpack.c.b16 %v162, %v159
    %v193 = vpack.c.b16 %v163, %v160
    %v194 = vpack.c.b16 %v167, %v164
    %v195 = vpack.c.b16 %v168, %v165
    %v196 = vpack.c.b16 %v169, %v166
    %v197 = vpack.c.b16 %v173, %v170
    %v198 = vpack.c.b16 %v174, %v171
    %v199 = vpack.c.b16 %v175, %v172
    %224 = vmatprep.subr.bf16.mxu0 %v198
    %225 = vmatpush1.bf16.msra.mxu0 %v197
    %226 = vmatprep.subr.bf16.mxu0 %v195
    %227 = vmatpush1.bf16.msra.mxu0 %v194
    %228 = vmatprep.subr.bf16.mxu0 %v192
    %229 = vmatpush1.bf16.msra.mxu0 %v191
    %230 = vmatprep.subr.bf16.mxu0 %v189
    %231 = vmatpush1.bf16.msra.mxu0 %v188
    %232 = vmatprep.subr.bf16.mxu0 %v186
    %233 = vmatpush1.bf16.msra.mxu0 %v185
    %234 = vmatprep.subr.bf16.mxu0 %v183
    %235 = vmatpush1.bf16.msra.mxu0 %v182
    %236 = vmatprep.subr.bf16.mxu0 %v180
    %237 = vmatpush1.bf16.msra.mxu0 %v179
    %238 = vmatprep.subr.bf16.mxu0 %v177
    %239 = vmatpush1.bf16.msra.mxu0 %v176
    %240 = vmatprep.subr.bf16.mxu0 0
    %241 = vmatpush2.bf16.msra.mxu0 0
    %242 = vmatprep.subr.bf16.mxu0 0
    %243 = vmatpush2.bf16.msra.mxu0 0
    %244 = vmatprep.subr.bf16.mxu0 0
    %245 = vmatpush2.bf16.msra.mxu0 0
    %246 = vmatprep.subr.bf16.mxu0 0
    %247 = vmatpush2.bf16.msra.mxu0 0
    %248 = vmatprep.subr.bf16.mxu0 0
    %249 = vmatpush2.bf16.msra.mxu0 0
    %250 = vmatprep.subr.bf16.mxu0 0
    %251 = vmatpush2.bf16.msra.mxu0 0
    %252 = vmatprep.subr.bf16.mxu0 0
    %253 = vmatpush2.bf16.msra.mxu0 0
    %254 = vmatprep.subr.bf16.mxu0 0
    %255 = vmatpush2.bf16.msra.mxu0 0
    %256 = vmatprep.mubr.bf16.mxu0 0
    %257 = vmatmul.mubr.bf16.gmra.mxu0 %v46
    %v258 = vpop.f32.mrf.mxu0
    %v259 = vadd.f32 %v84, %v258
    %v260 = vpop.f32.mrf.mxu0
    %v261 = vadd.f32 %v88, %v260
    %v262 = vpop.f32.mrf.mxu0
    %v263 = vadd.f32 %v84, %v262
    %v264 = vpop.f32.mrf.mxu0
    %v265 = vadd.f32 %v88, %v264
    %266 = vdwg.mxu0
    %267 = vmatprep.subr.bf16.mxu0 0
    %268 = vmatpush1.bf16.msra.mxu0 %v199
    %269 = vmatprep.subr.bf16.mxu0 0
    %270 = vmatpush1.bf16.msra.mxu0 %v196
    %271 = vmatprep.subr.bf16.mxu0 0
    %272 = vmatpush1.bf16.msra.mxu0 %v193
    %273 = vmatprep.subr.bf16.mxu0 0
    %274 = vmatpush1.bf16.msra.mxu0 %v190
    %275 = vmatprep.subr.bf16.mxu0 0
    %276 = vmatpush1.bf16.msra.mxu0 %v187
    %277 = vmatprep.subr.bf16.mxu0 0
    %278 = vmatpush1.bf16.msra.mxu0 %v184
    %279 = vmatprep.subr.bf16.mxu0 0
    %280 = vmatpush1.bf16.msra.mxu0 %v181
    %281 = vmatprep.subr.bf16.mxu0 0
    %282 = vmatpush1.bf16.msra.mxu0 %v178
    %283 = vmatprep.subr.bf16.mxu0 0
    %284 = vmatpush2.bf16.msra.mxu0 0
    %285 = vmatprep.subr.bf16.mxu0 0
    %286 = vmatpush2.bf16.msra.mxu0 0
    %287 = vmatprep.subr.bf16.mxu0 0
    %288 = vmatpush2.bf16.msra.mxu0 0
    %289 = vmatprep.subr.bf16.mxu0 0
    %290 = vmatpush2.bf16.msra.mxu0 0
    %291 = vmatprep.subr.bf16.mxu0 0
    %292 = vmatpush2.bf16.msra.mxu0 0
    %293 = vmatprep.subr.bf16.mxu0 0
    %294 = vmatpush2.bf16.msra.mxu0 0
    %295 = vmatprep.subr.bf16.mxu0 0
    %296 = vmatpush2.bf16.msra.mxu0 0
    %297 = vmatprep.subr.bf16.mxu0 0
    %298 = vmatpush2.bf16.msra.mxu0 0
    %299 = vmatprep.mubr.bf16.mxu0 0
    %300 = vmatmul.mubr.bf16.gmra.mxu0 %v46
    %v301 = vpop.f32.mrf.mxu0
    %v302 = vadd.f32 %v92, %v301
    %v303 = vpop.f32.mrf.mxu0
    %v304 = vpop.f32.mrf.mxu0
    %v305 = vadd.f32 %v92, %v304
    %v306 = vpop.f32.mrf.mxu0
    %307 = vdwg.mxu0
    %v308 = vpack.c.bf16 %v259, %v259
    %v309 = vpack.c.bf16 %v263, %v263
    %v310 = vpack.c.bf16 %v261, %v261
    %v311 = vpack.c.bf16 %v265, %v265
    %v312 = vpack.c.bf16 %v302, %v302
    %v313 = vpack.c.bf16 %v305, %v305
    %314 = vmatprep.subr.bf16.mxu0 0
    %315 = vmatpush1.bf16.xpose.msra.mxu0 0
    %316 = vmatprep.subr.bf16.mxu0 0
    %317 = vmatpush1.bf16.xpose.msra.mxu0 0
    %318 = vmatprep.subr.bf16.mxu0 0
    %319 = vmatpush1.bf16.xpose.msra.mxu0 0
    %320 = vmatprep.subr.bf16.mxu0 0
    %321 = vmatpush1.bf16.xpose.msra.mxu0 0
    %322 = vmatprep.subr.bf16.mxu0 0
    %323 = vmatpush1.bf16.xpose.msra.mxu0 0
    %324 = vmatprep.subr.bf16.mxu0 0
    %325 = vmatpush1.bf16.xpose.msra.mxu0 0
    %326 = vmatprep.subr.bf16.mxu0 0
    %327 = vmatpush1.bf16.xpose.msra.mxu0 0
    %328 = vmatprep.subr.bf16.mxu0 0
    %329 = vmatpush1.bf16.xpose.msra.mxu0 %v310
    %330 = vmatprep.subr.bf16.mxu0 0
    %331 = vmatpush2.bf16.xpose.msra.mxu0 0
    %332 = vmatprep.subr.bf16.mxu0 0
    %333 = vmatpush2.bf16.xpose.msra.mxu0 0
    %334 = vmatprep.subr.bf16.mxu0 0
    %335 = vmatpush2.bf16.xpose.msra.mxu0 0
    %336 = vmatprep.subr.bf16.mxu0 0
    %337 = vmatpush2.bf16.xpose.msra.mxu0 0
    %338 = vmatprep.subr.bf16.mxu0 0
    %339 = vmatpush2.bf16.xpose.msra.mxu0 0
    %340 = vmatprep.subr.bf16.mxu0 0
    %341 = vmatpush2.bf16.xpose.msra.mxu0 0
    %342 = vmatprep.subr.bf16.mxu0 0
    %343 = vmatpush2.bf16.xpose.msra.mxu0 0
    %344 = vmatprep.subr.bf16.mxu0 0
    %345 = vmatpush2.bf16.xpose.msra.mxu0 0
    %346 = vmatprep.mubr.bf16.mxu0 0
    %347 = vmatmul.mubr.bf16.gmra.mxu0 %v308
    %v348 = vpop.f32.mrf.mxu0
    %v349 = vadd.f32 0.0, %v348
    %v350 = vpop.f32.mrf.mxu0
    %v351 = vpop.f32.mrf.mxu0
    %v352 = vpop.f32.mrf.mxu0
    %353 = vdwg.mxu0
    %354 = vmatprep.subr.bf16.mxu0 0
    %355 = vmatpush1.bf16.xpose.msra.mxu0 0
    %356 = vmatprep.subr.bf16.mxu0 0
    %357 = vmatpush1.bf16.xpose.msra.mxu0 0
    %358 = vmatprep.subr.bf16.mxu0 0
    %359 = vmatpush1.bf16.xpose.msra.mxu0 0
    %360 = vmatprep.subr.bf16.mxu0 0
    %361 = vmatpush1.bf16.xpose.msra.mxu0 0
    %362 = vmatprep.subr.bf16.mxu0 0
    %363 = vmatpush1.bf16.xpose.msra.mxu0 0
    %364 = vmatprep.subr.bf16.mxu0 0
    %365 = vmatpush1.bf16.xpose.msra.mxu0 0
    %366 = vmatprep.subr.bf16.mxu0 0
    %367 = vmatpush1.bf16.xpose.msra.mxu0 0
    %368 = vmatprep.subr.bf16.mxu0 0
    %369 = vmatpush1.bf16.xpose.msra.mxu0 %v311
    %370 = vmatprep.subr.bf16.mxu0 0
    %371 = vmatpush2.bf16.xpose.msra.mxu0 0
    %372 = vmatprep.subr.bf16.mxu0 0
    %373 = vmatpush2.bf16.xpose.msra.mxu0 0
    %374 = vmatprep.subr.bf16.mxu0 0
    %375 = vmatpush2.bf16.xpose.msra.mxu0 0
    %376 = vmatprep.subr.bf16.mxu0 0
    %377 = vmatpush2.bf16.xpose.msra.mxu0 0
    %378 = vmatprep.subr.bf16.mxu0 0
    %379 = vmatpush2.bf16.xpose.msra.mxu0 0
    %380 = vmatprep.subr.bf16.mxu0 0
    %381 = vmatpush2.bf16.xpose.msra.mxu0 0
    %382 = vmatprep.subr.bf16.mxu0 0
    %383 = vmatpush2.bf16.xpose.msra.mxu0 0
    %384 = vmatprep.subr.bf16.mxu0 0
    %385 = vmatpush2.bf16.xpose.msra.mxu0 0
    %386 = vmatprep.mubr.bf16.mxu0 0
    %387 = vmatmul.mubr.bf16.gmra.mxu0 %v309
    %v388 = vpop.f32.mrf.mxu0
    %v389 = vadd.f32 0.0, %v388
    %v390 = vpop.f32.mrf.mxu0
    %v391 = vpop.f32.mrf.mxu0
    %v392 = vpop.f32.mrf.mxu0
    %393 = vdwg.mxu0
    %vm394 = vcmask 64512
    %v395 = vsel %vm394, %v349, -inf
    %396 = vmax.xlane.f32.xlu0 %v395
    %v397 = vpop.xlane.xlu0 %396
    %v398 = vsel %vm394, %v389, -inf
    %399 = vmax.xlane.f32.xlu0 %v398
    %v400 = vpop.xlane.xlu0 %399
    %v401 = vsub.f32 %v349, %v397
    %v402 = vsub.f32 %v389, %v400
    %v403 = vmul.f32 %v401, 1.442695
    %v404 = vpow.pop %v403
    %v405 = vmul.f32 %v402, 1.442695
    %v406 = vpow.pop %v405
    %v407 = vsel %vm394, %v404, 0.0
    %408 = vadd.xlane.f32.xlu0 %v407
    %v409 = vpop.xlane.xlu0 %408
    %v410 = vsel %vm394, %v406, 0.0
    %411 = vadd.xlane.f32.xlu0 %v410
    %v412 = vpop.xlane.xlu0 %411
    %v413 = vpack.c.bf16 %v404, %v404
    %v414 = vpack.c.bf16 %v406, %v406
    %v416 = vsel %vm394, %v413, 0
    %vm418 = vcmask 1043456
    %v420 = vsel %vm418, %v312, 0
    %422 = vmatprep.subr.bf16.mxu0 0
    %423 = vmatpush1.bf16.msra.mxu0 0
    %424 = vmatprep.subr.bf16.mxu0 0
    %425 = vmatpush1.bf16.msra.mxu0 0
    %426 = vmatprep.subr.bf16.mxu0 0
    %427 = vmatpush1.bf16.msra.mxu0 0
    %428 = vmatprep.subr.bf16.mxu0 0
    %429 = vmatpush1.bf16.msra.mxu0 0
    %430 = vmatprep.subr.bf16.mxu0 0
    %431 = vmatpush1.bf16.msra.mxu0 0
    %432 = vmatprep.subr.bf16.mxu0 0
    %433 = vmatpush1.bf16.msra.mxu0 0
    %434 = vmatprep.subr.bf16.mxu0 0
    %435 = vmatpush1.bf16.msra.mxu0 0
    %436 = vmatprep.subr.bf16.mxu0 0
    %437 = vmatpush1.bf16.msra.mxu0 %v420
    %438 = vmatprep.subr.bf16.mxu0 0
    %439 = vmatpush2.bf16.msra.mxu0 0
    %440 = vmatprep.subr.bf16.mxu0 0
    %441 = vmatpush2.bf16.msra.mxu0 0
    %442 = vmatprep.subr.bf16.mxu0 0
    %443 = vmatpush2.bf16.msra.mxu0 0
    %444 = vmatprep.subr.bf16.mxu0 0
    %445 = vmatpush2.bf16.msra.mxu0 0
    %446 = vmatprep.subr.bf16.mxu0 0
    %447 = vmatpush2.bf16.msra.mxu0 0
    %448 = vmatprep.subr.bf16.mxu0 0
    %449 = vmatpush2.bf16.msra.mxu0 0
    %450 = vmatprep.subr.bf16.mxu0 0
    %451 = vmatpush2.bf16.msra.mxu0 0
    %452 = vmatprep.subr.bf16.mxu0 0
    %453 = vmatpush2.bf16.msra.mxu0 0
    %454 = vmatprep.mubr.bf16.mxu0 0
    %455 = vmatmul.mubr.bf16.gmra.mxu0 %v416
    %v456 = vpop.f32.mrf.mxu0
    %v457 = vadd.f32 0.0, %v456
    %v458 = vpop.f32.mrf.mxu0
    %v459 = vpop.f32.mrf.mxu0
    %v460 = vpop.f32.mrf.mxu0
    %461 = vdwg.mxu0
    %v463 = vsel %vm394, %v414, 0
    %v466 = vsel %vm418, %v313, 0
    %468 = vmatprep.subr.bf16.mxu0 0
    %469 = vmatpush1.bf16.msra.mxu0 0
    %470 = vmatprep.subr.bf16.mxu0 0
    %471 = vmatpush1.bf16.msra.mxu0 0
    %472 = vmatprep.subr.bf16.mxu0 0
    %473 = vmatpush1.bf16.msra.mxu0 0
    %474 = vmatprep.subr.bf16.mxu0 0
    %475 = vmatpush1.bf16.msra.mxu0 0
    %476 = vmatprep.subr.bf16.mxu0 0
    %477 = vmatpush1.bf16.msra.mxu0 0
    %478 = vmatprep.subr.bf16.mxu0 0
    %479 = vmatpush1.bf16.msra.mxu0 0
    %480 = vmatprep.subr.bf16.mxu0 0
    %481 = vmatpush1.bf16.msra.mxu0 0
    %482 = vmatprep.subr.bf16.mxu0 0
    %483 = vmatpush1.bf16.msra.mxu0 %v466
    %484 = vmatprep.subr.bf16.mxu0 0
    %485 = vmatpush2.bf16.msra.mxu0 0
    %486 = vmatprep.subr.bf16.mxu0 0
    %487 = vmatpush2.bf16.msra.mxu0 0
    %488 = vmatprep.subr.bf16.mxu0 0
    %489 = vmatpush2.bf16.msra.mxu0 0
    %490 = vmatprep.subr.bf16.mxu0 0
    %491 = vmatpush2.bf16.msra.mxu0 0
    %492 = vmatprep.subr.bf16.mxu0 0
    %493 = vmatpush2.bf16.msra.mxu0 0
    %494 = vmatprep.subr.bf16.mxu0 0
    %495 = vmatpush2.bf16.msra.mxu0 0
    %496 = vmatprep.subr.bf16.mxu0 0
    %497 = vmatpush2.bf16.msra.mxu0 0
    %498 = vmatprep.subr.bf16.mxu0 0
    %499 = vmatpush2.bf16.msra.mxu0 0
    %500 = vmatprep.mubr.bf16.mxu0 0
    %501 = vmatmul.mubr.bf16.gmra.mxu0 %v463
    %v502 = vpop.f32.mrf.mxu0
    %v503 = vadd.f32 0.0, %v502
    %v504 = vpop.f32.mrf.mxu0
    %v505 = vpop.f32.mrf.mxu0
    %v506 = vpop.f32.mrf.mxu0
    %507 = vdwg.mxu0
    %v508 = vrcp.pop %v409
    %v509 = vrcp.pop %v412
    %v510 = vmul.f32 %v457, %v508
    %v511 = vmul.f32 %v503, %v509
    %v512 = vrot.slane %v510, 4
    %v513 = vadd.f32 %v510, %v512
    %v514 = vrot.slane %v513, 2
    %v515 = vadd.f32 %v513, %v514
    %v516 = vrot.slane %v515, 1
    %v517 = vadd.f32 %v515, %v516
    %v518 = vrot.slane %v511, 4
    %v519 = vadd.f32 %v511, %v518
    %v520 = vrot.slane %v519, 2
    %v521 = vadd.f32 %v519, %v520
    %v522 = vrot.slane %v521, 1
    %v523 = vadd.f32 %v521, %v522
    %v524 = vmul.f32 %v517, 0.125
    %v525 = vmul.f32 %v523, 0.125
    %v526 = vmul.f32 %v44, %v510
    %v527 = vmul.f32 %v45, %v511
    %v528 = vrot.slane %v526, 4
    %v529 = vadd.f32 %v526, %v528
    %v530 = vrot.slane %v529, 2
    %v531 = vadd.f32 %v529, %v530
    %v532 = vrot.slane %v531, 1
    %v533 = vadd.f32 %v531, %v532
    %v534 = vrot.slane %v527, 4
    %v535 = vadd.f32 %v527, %v534
    %v536 = vrot.slane %v535, 2
    %v537 = vadd.f32 %v535, %v536
    %v538 = vrot.slane %v537, 1
    %v539 = vadd.f32 %v537, %v538
    %v540 = vmul.f32 %v524, %v524
    %v541 = vmul.f32 %v525, %v525
    %v542 = vsub.f32 %v533, %v540
    %v543 = vsub.f32 %v539, %v541
    %vm546 = vcmask 1041409
    %v547 = vsel %vm546, %v525, %v524
    %v550 = vsel %vm546, %v543, %v542
    %v551 = vcombine.low %v547, %v550
    %v553 = vunpack.c.l.s4 1983009808
    %v554 = vunpack.c.0.s8 %v553
    %v555 = vlaneseq
    %v556 = vshrl.u32 %v555, 7
    %v557 = vsub.s32 %v554, %v556
    %v558 = vrot.slane %v551, %v557
    %560 = vst [vmem:[#allocation7] sm:$0xf] %v558
    // Predicated region
    $region22: #{tpu_custom_call.1} parent=1 // pred_check
      _
    $region23: #{tpu_custom_call.1} parent=1 // pred_check_branch
      %562 = sbr.rel (0) target = $region25
    $region24: #{tpu_custom_call.1} parent=1 // pred_region
      %s564 = ssub.s32 64, 64
      %565 = vsyncadd [#allocation4], %s564
      %s567 = sshll.u32 [#allocation7], 4
      %s568 = int_to_ptr.vmem [resolvable:$true] %s567
      %570 = dma.vmem_to_hbm [thread:$0]  %s568, 64, %s3, [#allocation4]
    $region25: #{tpu_custom_call.1} parent=1 // pred_fallthru
      _
    // Predicated region
    $region26: #{tpu_custom_call.1} parent=1 // pred_check
      _
    $region27: #{tpu_custom_call.1} parent=1 // pred_check_branch
      %572 = sbr.rel (0) target = $region29
    $region28: #{tpu_custom_call.1} parent=1 // pred_region
      %573 = dma.done [#allocation4], 64
    $region29: #{tpu_custom_call.1} parent=1 // pred_fallthru
      _
    %574 = vsyncpa [#allocation3], 1
    %575 = vsyncpa [#allocation6], 1
    %576 = vsyncpa [#allocation4], 1

// kernel: tpu_custom_call.1
$region0: #{tpu_custom_call.1}
  #allocation0 [shape = 'u32[]', space=smem, size = 0x4, offset = 0x4, fixed_abs, tag = 'smem constant byte address 0x4 - core index']
  #allocation1 [shape = 'u32[144,128]{1,0:T(1,128)}', space=vmem, size = 0x12000, scoped, tag = 'internal scratch']
  %s0 = inlined_call_operand.hbm [shape: f32[2,8,128], index: 0, kind: input, shape index: {}]
  %s1 = inlined_call_operand.hbm [shape: bf16[128,384], index: 1, kind: input, shape index: {}]
  %s2 = inlined_call_operand.vmem [shape: f32[1,384], index: 2, kind: input, shape index: {}]
  %s3 = inlined_call_operand.hbm [shape: f32[2,256], index: 3, kind: output, shape index: {}]
  %s4 = sld [smem:[#allocation0]]
  $region30: #{tpu_custom_call.1} parent=0
    _
  %s6 = ssub.s32 1, %s4
  %s7 = scalar_select 0, %s6, %s4
  $region1: #{tpu_custom_call.1} parent=0
    #allocation2 [shape = 'u8[8192]{0}', space=vmem, size = 0x2000, scoped, tag = 'input window, operand 0, single buffered']
    #allocation3 [shape = 's32[1]{0}', space=sflag, size = 0x4, scoped, tag = 'scoped memory for tpu_custom_call.1']
    #allocation4 [shape = 's32[1]{0}', space=sflag, size = 0x4, scoped, tag = 'scoped memory for tpu_custom_call.1']
    #allocation5 [shape = 'u8[98304]{0}', space=vmem, size = 0x18000, scoped, tag = 'input window, operand 1, single buffered']
    #allocation6 [shape = 's32[1]{0}', space=sflag, size = 0x4, scoped, tag = 'scoped memory for tpu_custom_call.1']
    #allocation7 [shape = 'u8[2048]{0}', space=vmem, size = 0x800, scoped, tag = 'output window, operand 0, single buffered']
    %8 = vsyncpa [#allocation3], 0
    %9 = vsyncpa [#allocation6], 0
    %10 = vsyncpa [#allocation4], 0
    // Predicated region
    $region2: #{tpu_custom_call.1} parent=1 // pred_check
      _
    $region3: #{tpu_custom_call.1} parent=1 // pred_check_branch
      %12 = sbr.rel (0) target = $region5
    $region4: #{tpu_custom_call.1} parent=1 // pred_region
      %s14 = ssub.s32 256, 256
      %15 = vsyncadd [#allocation3], %s14
      %s16 = sshll.u32 [#allocation2], 4
      %s17 = int_to_ptr.vmem [resolvable:$true] %s16
      %22 = dma.hbm_to_vmem [thread:$0]  %s0, 256, %s17, [#allocation3], 128, 128, 8
    $region5: #{tpu_custom_call.1} parent=1 // pred_fallthru
      _
    // Predicated region
    $region6: #{tpu_custom_call.1} parent=1 // pred_check
      _
    $region7: #{tpu_custom_call.1} parent=1 // pred_check_branch
      %24 = sbr.rel (0) target = $region9
    $region8: #{tpu_custom_call.1} parent=1 // pred_region
      %s26 = ssub.s32 3072, 3072
      %27 = vsyncadd [#allocation6], %s26
      %s28 = sshll.u32 [#allocation5], 4
      %s29 = int_to_ptr.vmem [resolvable:$true] %s28
      %34 = dma.hbm_to_vmem [thread:$0]  %s1, 3072, %s29, [#allocation6], 192, 192, 12
    $region9: #{tpu_custom_call.1} parent=1 // pred_fallthru
      _
    // Predicated region
    $region10: #{tpu_custom_call.1} parent=1 // pred_check
      _
    $region11: #{tpu_custom_call.1} parent=1 // pred_check_branch
      %36 = sbr.rel (0) target = $region13
    $region12: #{tpu_custom_call.1} parent=1 // pred_region
      _
    $region13: #{tpu_custom_call.1} parent=1 // pred_fallthru
      _
    // Predicated region
    $region14: #{tpu_custom_call.1} parent=1 // pred_check
      _
    $region15: #{tpu_custom_call.1} parent=1 // pred_check_branch
      %38 = sbr.rel (0) target = $region17
    $region16: #{tpu_custom_call.1} parent=1 // pred_region
      %39 = dma.done [#allocation3], 256
    $region17: #{tpu_custom_call.1} parent=1 // pred_fallthru
      _
    // Predicated region
    $region18: #{tpu_custom_call.1} parent=1 // pred_check
      _
    $region19: #{tpu_custom_call.1} parent=1 // pred_check_branch
      %41 = sbr.rel (0) target = $region21
    $region20: #{tpu_custom_call.1} parent=1 // pred_region
      %42 = dma.done [#allocation6], 3072
    $region21: #{tpu_custom_call.1} parent=1 // pred_fallthru
      _
    %v44 = vld [vmem:[#allocation2] sm:$0xff]
    %v45 = vld [vmem:[#allocation2 + $0x8] sm:$0xff]
    %v46 = vpack.c.bf16 %v45, %v44
    %v47 = vld [vmem:[#allocation5] sm:$0xff]
    %v48 = vld [vmem:[#allocation5 + $0x8] sm:$0xf]
    %v49 = vld [vmem:[#allocation5 + $0xc] sm:$0xff]
    %v50 = vld [vmem:[#allocation5 + $0x14] sm:$0xf]
    %v51 = vld [vmem:[#allocation5 + $0x18] sm:$0xff]
    %v52 = vld [vmem:[#allocation5 + $0x20] sm:$0xf]
    %v53 = vld [vmem:[#allocation5 + $0x24] sm:$0xff]
    %v54 = vld [vmem:[#allocation5 + $0x2c] sm:$0xf]
    %v55 = vld [vmem:[#allocation5 + $0x30] sm:$0xff]
    %v56 = vld [vmem:[#allocation5 + $0x38] sm:$0xf]
    %v57 = vld [vmem:[#allocation5 + $0x3c] sm:$0xff]
    %v58 = vld [vmem:[#allocation5 + $0x44] sm:$0xf]
    %v59 = vld [vmem:[#allocation5 + $0x48] sm:$0xff]
    %v60 = vld [vmem:[#allocation5 + $0x50] sm:$0xf]
    %v61 = vld [vmem:[#allocation5 + $0x54] sm:$0xff]
    %v62 = vld [vmem:[#allocation5 + $0x5c] sm:$0xf]
    %v63 = vld [vmem:[#allocation5 + $0x60] sm:$0xff]
    %v64 = vld [vmem:[#allocation5 + $0x68] sm:$0xf]
    %v65 = vld [vmem:[#allocation5 + $0x6c] sm:$0xff]
    %v66 = vld [vmem:[#allocation5 + $0x74] sm:$0xf]
    %v67 = vld [vmem:[#allocation5 + $0x78] sm:$0xff]
    %v68 = vld [vmem:[#allocation5 + $0x80] sm:$0xf]
    %v69 = vld [vmem:[#allocation5 + $0x84] sm:$0xff]
    %v70 = vld [vmem:[#allocation5 + $0x8c] sm:$0xf]
    %v71 = vld [vmem:[#allocation5 + $0x90] sm:$0xff]
    %v72 = vld [vmem:[#allocation5 + $0x98] sm:$0xf]
    %v73 = vld [vmem:[#allocation5 + $0x9c] sm:$0xff]
    %v74 = vld [vmem:[#allocation5 + $0xa4] sm:$0xf]
    %v75 = vld [vmem:[#allocation5 + $0xa8] sm:$0xff]
    %v76 = vld [vmem:[#allocation5 + $0xb0] sm:$0xf]
    %v77 = vld [vmem:[#allocation5 + $0xb4] sm:$0xff]
    %v78 = vld [vmem:[#allocation5 + $0xbc] sm:$0xf]
    %v79 = vld [vmem:[%s2] sm:$0x7]
    %v81 = vlaneseq
    %v82 = vshrl.u32 %v81, 7
    %v83 = vsub.s32 0, %v82
    %v84 = vrot.slane %v79, %v83
    %v85 = vlaneseq
    %v86 = vshrl.u32 %v85, 7
    %v87 = vsub.s32 1, %v86
    %v88 = vrot.slane %v79, %v87
    %v89 = vlaneseq
    %v90 = vshrl.u32 %v89, 7
    %v91 = vsub.s32 2, %v90
    %v92 = vrot.slane %v79, %v91
    %v128 = vunpack.c.l.b16 %v47
    %v129 = vunpack.c.h.b16 %v47
    %v130 = vunpack.c.l.b16 %v48
    %v131 = vunpack.c.l.b16 %v49
    %v132 = vunpack.c.h.b16 %v49
    %v133 = vunpack.c.l.b16 %v50
    %v134 = vunpack.c.l.b16 %v51
    %v135 = vunpack.c.h.b16 %v51
    %v136 = vunpack.c.l.b16 %v52
    %v137 = vunpack.c.l.b16 %v53
    %v138 = vunpack.c.h.b16 %v53
    %v139 = vunpack.c.l.b16 %v54
    %v140 = vunpack.c.l.b16 %v55
    %v141 = vunpack.c.h.b16 %v55
    %v142 = vunpack.c.l.b16 %v56
    %v143 = vunpack.c.l.b16 %v57
    %v144 = vunpack.c.h.b16 %v57
    %v145 = vunpack.c.l.b16 %v58
    %v146 = vunpack.c.l.b16 %v59
    %v147 = vunpack.c.h.b16 %v59
    %v148 = vunpack.c.l.b16 %v60
    %v149 = vunpack.c.l.b16 %v61
    %v150 = vunpack.c.h.b16 %v61
    %v151 = vunpack.c.l.b16 %v62
    %v152 = vunpack.c.l.b16 %v63
    %v153 = vunpack.c.h.b16 %v63
    %v154 = vunpack.c.l.b16 %v64
    %v155 = vunpack.c.l.b16 %v65
    %v156 = vunpack.c.h.b16 %v65
    %v157 = vunpack.c.l.b16 %v66
    %v158 = vunpack.c.l.b16 %v67
    %v159 = vunpack.c.h.b16 %v67
    %v160 = vunpack.c.l.b16 %v68
    %v161 = vunpack.c.l.b16 %v69
    %v162 = vunpack.c.h.b16 %v69
    %v163 = vunpack.c.l.b16 %v70
    %v164 = vunpack.c.l.b16 %v71
    %v165 = vunpack.c.h.b16 %v71
    %v166 = vunpack.c.l.b16 %v72
    %v167 = vunpack.c.l.b16 %v73
    %v168 = vunpack.c.h.b16 %v73
    %v169 = vunpack.c.l.b16 %v74
    %v170 = vunpack.c.l.b16 %v75
    %v171 = vunpack.c.h.b16 %v75
    %v172 = vunpack.c.l.b16 %v76
    %v173 = vunpack.c.l.b16 %v77
    %v174 = vunpack.c.h.b16 %v77
    %v175 = vunpack.c.l.b16 %v78
    %v176 = vpack.c.b16 %v131, %v128
    %v177 = vpack.c.b16 %v132, %v129
    %v178 = vpack.c.b16 %v133, %v130
    %v179 = vpack.c.b16 %v137, %v134
    %v180 = vpack.c.b16 %v138, %v135
    %v181 = vpack.c.b16 %v139, %v136
    %v182 = vpack.c.b16 %v143, %v140
    %v183 = vpack.c.b16 %v144, %v141
    %v184 = vpack.c.b16 %v145, %v142
    %v185 = vpack.c.b16 %v149, %v146
    %v186 = vpack.c.b16 %v150, %v147
    %v187 = vpack.c.b16 %v151, %v148
    %v188 = vpack.c.b16 %v155, %v152
    %v189 = vpack.c.b16 %v156, %v153
    %v190 = vpack.c.b16 %v157, %v154
    %v191 = vpack.c.b16 %v161, %v158
    %v192 = vpack.c.b16 %v162, %v159
    %v193 = vpack.c.b16 %v163, %v160
    %v194 = vpack.c.b16 %v167, %v164
    %v195 = vpack.c.b16 %v168, %v165
    %v196 = vpack.c.b16 %v169, %v166
    %v197 = vpack.c.b16 %v173, %v170
    %v198 = vpack.c.b16 %v174, %v171
    %v199 = vpack.c.b16 %v175, %v172
    %224 = vmatprep.subr.bf16.mxu0 %v198
    %225 = vmatpush1.bf16.msra.mxu0 %v197
    %226 = vmatprep.subr.bf16.mxu0 %v195
    %227 = vmatpush1.bf16.msra.mxu0 %v194
    %228 = vmatprep.subr.bf16.mxu0 %v192
    %229 = vmatpush1.bf16.msra.mxu0 %v191
    %230 = vmatprep.subr.bf16.mxu0 %v189
    %231 = vmatpush1.bf16.msra.mxu0 %v188
    %232 = vmatprep.subr.bf16.mxu0 %v186
    %233 = vmatpush1.bf16.msra.mxu0 %v185
    %234 = vmatprep.subr.bf16.mxu0 %v183
    %235 = vmatpush1.bf16.msra.mxu0 %v182
    %236 = vmatprep.subr.bf16.mxu0 %v180
    %237 = vmatpush1.bf16.msra.mxu0 %v179
    %238 = vmatprep.subr.bf16.mxu0 %v177
    %239 = vmatpush1.bf16.msra.mxu0 %v176
    %240 = vmatprep.subr.bf16.mxu0 0
    %241 = vmatpush2.bf16.msra.mxu0 0
    %242 = vmatprep.subr.bf16.mxu0 0
    %243 = vmatpush2.bf16.msra.mxu0 0
    %244 = vmatprep.subr.bf16.mxu0 0
    %245 = vmatpush2.bf16.msra.mxu0 0
    %246 = vmatprep.subr.bf16.mxu0 0
    %247 = vmatpush2.bf16.msra.mxu0 0
    %248 = vmatprep.subr.bf16.mxu0 0
    %249 = vmatpush2.bf16.msra.mxu0 0
    %250 = vmatprep.subr.bf16.mxu0 0
    %251 = vmatpush2.bf16.msra.mxu0 0
    %252 = vmatprep.subr.bf16.mxu0 0
    %253 = vmatpush2.bf16.msra.mxu0 0
    %254 = vmatprep.subr.bf16.mxu0 0
    %255 = vmatpush2.bf16.msra.mxu0 0
    %256 = vmatprep.mubr.bf16.mxu0 0
    %257 = vmatmul.mubr.bf16.gmra.mxu0 %v46
    %v258 = vpop.f32.mrf.mxu0
    %v259 = vadd.f32 %v84, %v258
    %v260 = vpop.f32.mrf.mxu0
    %v261 = vadd.f32 %v88, %v260
    %v262 = vpop.f32.mrf.mxu0
    %v263 = vadd.f32 %v84, %v262
    %v264 = vpop.f32.mrf.mxu0
    %v265 = vadd.f32 %v88, %v264
    %266 = vdwg.mxu0
    %267 = vmatprep.subr.bf16.mxu0 0
    %268 = vmatpush1.bf16.msra.mxu0 %v199
    %269 = vmatprep.subr.bf16.mxu0 0
    %270 = vmatpush1.bf16.msra.mxu0 %v196
    %271 = vmatprep.subr.bf16.mxu0 0
    %272 = vmatpush1.bf16.msra.mxu0 %v193
    %273 = vmatprep.subr.bf16.mxu0 0
    %274 = vmatpush1.bf16.msra.mxu0 %v190
    %275 = vmatprep.subr.bf16.mxu0 0
    %276 = vmatpush1.bf16.msra.mxu0 %v187
    %277 = vmatprep.subr.bf16.mxu0 0
    %278 = vmatpush1.bf16.msra.mxu0 %v184
    %279 = vmatprep.subr.bf16.mxu0 0
    %280 = vmatpush1.bf16.msra.mxu0 %v181
    %281 = vmatprep.subr.bf16.mxu0 0
    %282 = vmatpush1.bf16.msra.mxu0 %v178
    %283 = vmatprep.subr.bf16.mxu0 0
    %284 = vmatpush2.bf16.msra.mxu0 0
    %285 = vmatprep.subr.bf16.mxu0 0
    %286 = vmatpush2.bf16.msra.mxu0 0
    %287 = vmatprep.subr.bf16.mxu0 0
    %288 = vmatpush2.bf16.msra.mxu0 0
    %289 = vmatprep.subr.bf16.mxu0 0
    %290 = vmatpush2.bf16.msra.mxu0 0
    %291 = vmatprep.subr.bf16.mxu0 0
    %292 = vmatpush2.bf16.msra.mxu0 0
    %293 = vmatprep.subr.bf16.mxu0 0
    %294 = vmatpush2.bf16.msra.mxu0 0
    %295 = vmatprep.subr.bf16.mxu0 0
    %296 = vmatpush2.bf16.msra.mxu0 0
    %297 = vmatprep.subr.bf16.mxu0 0
    %298 = vmatpush2.bf16.msra.mxu0 0
    %299 = vmatprep.mubr.bf16.mxu0 0
    %300 = vmatmul.mubr.bf16.gmra.mxu0 %v46
    %v301 = vpop.f32.mrf.mxu0
    %v302 = vadd.f32 %v92, %v301
    %v303 = vpop.f32.mrf.mxu0
    %v304 = vpop.f32.mrf.mxu0
    %v305 = vadd.f32 %v92, %v304
    %v306 = vpop.f32.mrf.mxu0
    %307 = vdwg.mxu0
    %v308 = vpack.c.bf16 %v259, %v259
    %v309 = vpack.c.bf16 %v263, %v263
    %v310 = vpack.c.bf16 %v261, %v261
    %v311 = vpack.c.bf16 %v265, %v265
    %v312 = vpack.c.bf16 %v302, %v302
    %v313 = vpack.c.bf16 %v305, %v305
    %314 = vmatprep.subr.bf16.mxu0 0
    %315 = vmatpush1.bf16.xpose.msra.mxu0 0
    %316 = vmatprep.subr.bf16.mxu0 0
    %317 = vmatpush1.bf16.xpose.msra.mxu0 0
    %318 = vmatprep.subr.bf16.mxu0 0
    %319 = vmatpush1.bf16.xpose.msra.mxu0 0
    %320 = vmatprep.subr.bf16.mxu0 0
    %321 = vmatpush1.bf16.xpose.msra.mxu0 0
    %322 = vmatprep.subr.bf16.mxu0 0
    %323 = vmatpush1.bf16.xpose.msra.mxu0 0
    %324 = vmatprep.subr.bf16.mxu0 0
    %325 = vmatpush1.bf16.xpose.msra.mxu0 0
    %326 = vmatprep.subr.bf16.mxu0 0
    %327 = vmatpush1.bf16.xpose.msra.mxu0 0
    %328 = vmatprep.subr.bf16.mxu0 0
    %329 = vmatpush1.bf16.xpose.msra.mxu0 %v310
    %330 = vmatprep.subr.bf16.mxu0 0
    %331 = vmatpush2.bf16.xpose.msra.mxu0 0
    %332 = vmatprep.subr.bf16.mxu0 0
    %333 = vmatpush2.bf16.xpose.msra.mxu0 0
    %334 = vmatprep.subr.bf16.mxu0 0
    %335 = vmatpush2.bf16.xpose.msra.mxu0 0
    %336 = vmatprep.subr.bf16.mxu0 0
    %337 = vmatpush2.bf16.xpose.msra.mxu0 0
    %338 = vmatprep.subr.bf16.mxu0 0
    %339 = vmatpush2.bf16.xpose.msra.mxu0 0
    %340 = vmatprep.subr.bf16.mxu0 0
    %341 = vmatpush2.bf16.xpose.msra.mxu0 0
    %342 = vmatprep.subr.bf16.mxu0 0
    %343 = vmatpush2.bf16.xpose.msra.mxu0 0
    %344 = vmatprep.subr.bf16.mxu0 0
    %345 = vmatpush2.bf16.xpose.msra.mxu0 0
    %346 = vmatprep.mubr.bf16.mxu0 0
    %347 = vmatmul.mubr.bf16.gmra.mxu0 %v308
    %v348 = vpop.f32.mrf.mxu0
    %v349 = vadd.f32 0.0, %v348
    %v350 = vpop.f32.mrf.mxu0
    %v351 = vpop.f32.mrf.mxu0
    %v352 = vpop.f32.mrf.mxu0
    %353 = vdwg.mxu0
    %354 = vmatprep.subr.bf16.mxu0 0
    %355 = vmatpush1.bf16.xpose.msra.mxu0 0
    %356 = vmatprep.subr.bf16.mxu0 0
    %357 = vmatpush1.bf16.xpose.msra.mxu0 0
    %358 = vmatprep.subr.bf16.mxu0 0
    %359 = vmatpush1.bf16.xpose.msra.mxu0 0
    %360 = vmatprep.subr.bf16.mxu0 0
    %361 = vmatpush1.bf16.xpose.msra.mxu0 0
    %362 = vmatprep.subr.bf16.mxu0 0
    %363 = vmatpush1.bf16.xpose.msra.mxu0 0
    %364 = vmatprep.subr.bf16.mxu0 0
    %365 = vmatpush1.bf16.xpose.msra.mxu0 0
    %366 = vmatprep.subr.bf16.mxu0 0
    %367 = vmatpush1.bf16.xpose.msra.mxu0 0
    %368 = vmatprep.subr.bf16.mxu0 0
    %369 = vmatpush1.bf16.xpose.msra.mxu0 %v311
    %370 = vmatprep.subr.bf16.mxu0 0
    %371 = vmatpush2.bf16.xpose.msra.mxu0 0
    %372 = vmatprep.subr.bf16.mxu0 0
    %373 = vmatpush2.bf16.xpose.msra.mxu0 0
    %374 = vmatprep.subr.bf16.mxu0 0
    %375 = vmatpush2.bf16.xpose.msra.mxu0 0
    %376 = vmatprep.subr.bf16.mxu0 0
    %377 = vmatpush2.bf16.xpose.msra.mxu0 0
    %378 = vmatprep.subr.bf16.mxu0 0
    %379 = vmatpush2.bf16.xpose.msra.mxu0 0
    %380 = vmatprep.subr.bf16.mxu0 0
    %381 = vmatpush2.bf16.xpose.msra.mxu0 0
    %382 = vmatprep.subr.bf16.mxu0 0
    %383 = vmatpush2.bf16.xpose.msra.mxu0 0
    %384 = vmatprep.subr.bf16.mxu0 0
    %385 = vmatpush2.bf16.xpose.msra.mxu0 0
    %386 = vmatprep.mubr.bf16.mxu0 0
    %387 = vmatmul.mubr.bf16.gmra.mxu0 %v309
    %v388 = vpop.f32.mrf.mxu0
    %v389 = vadd.f32 0.0, %v388
    %v390 = vpop.f32.mrf.mxu0
    %v391 = vpop.f32.mrf.mxu0
    %v392 = vpop.f32.mrf.mxu0
    %393 = vdwg.mxu0
    %vm394 = vcmask 64512
    %v395 = vsel %vm394, %v349, -inf
    %396 = vmax.xlane.f32.xlu0 %v395
    %v397 = vpop.xlane.xlu0 %396
    %v398 = vsel %vm394, %v389, -inf
    %399 = vmax.xlane.f32.xlu0 %v398
    %v400 = vpop.xlane.xlu0 %399
    %v401 = vsub.f32 %v349, %v397
    %v402 = vsub.f32 %v389, %v400
    %v403 = vmul.f32 %v401, 1.442695
    %v404 = vpow.pop %v403
    %v405 = vmul.f32 %v402, 1.442695
    %v406 = vpow.pop %v405
    %v407 = vsel %vm394, %v404, 0.0
    %408 = vadd.xlane.f32.xlu0 %v407
    %v409 = vpop.xlane.xlu0 %408
    %v410 = vsel %vm394, %v406, 0.0
    %411 = vadd.xlane.f32.xlu0 %v410
    %v412 = vpop.xlane.xlu0 %411
    %v413 = vpack.c.bf16 %v404, %v404
    %v414 = vpack.c.bf16 %v406, %v406
    %v416 = vsel %vm394, %v413, 0
    %vm418 = vcmask 1043456
    %v420 = vsel %vm418, %v312, 0
    %422 = vmatprep.subr.bf16.mxu0 0
    %423 = vmatpush1.bf16.msra.mxu0 0
    %424 = vmatprep.subr.bf16.mxu0 0
    %425 = vmatpush1.bf16.msra.mxu0 0
    %426 = vmatprep.subr.bf16.mxu0 0
    %427 = vmatpush1.bf16.msra.mxu0 0
    %428 = vmatprep.subr.bf16.mxu0 0
    %429 = vmatpush1.bf16.msra.mxu0 0
    %430 = vmatprep.subr.bf16.mxu0 0
    %431 = vmatpush1.bf16.msra.mxu0 0
    %432 = vmatprep.subr.bf16.mxu0 0
    %433 = vmatpush1.bf16.msra.mxu0 0
    %434 = vmatprep.subr.bf16.mxu0 0
    %435 = vmatpush1.bf16.msra.mxu0 0
    %436 = vmatprep.subr.bf16.mxu0 0
    %437 = vmatpush1.bf16.msra.mxu0 %v420
    %438 = vmatprep.subr.bf16.mxu0 0
    %439 = vmatpush2.bf16.msra.mxu0 0
    %440 = vmatprep.subr.bf16.mxu0 0
    %441 = vmatpush2.bf16.msra.mxu0 0
    %442 = vmatprep.subr.bf16.mxu0 0
    %443 = vmatpush2.bf16.msra.mxu0 0
    %444 = vmatprep.subr.bf16.mxu0 0
    %445 = vmatpush2.bf16.msra.mxu0 0
    %446 = vmatprep.subr.bf16.mxu0 0
    %447 = vmatpush2.bf16.msra.mxu0 0
    %448 = vmatprep.subr.bf16.mxu0 0
    %449 = vmatpush2.bf16.msra.mxu0 0
    %450 = vmatprep.subr.bf16.mxu0 0
    %451 = vmatpush2.bf16.msra.mxu0 0
    %452 = vmatprep.subr.bf16.mxu0 0
    %453 = vmatpush2.bf16.msra.mxu0 0
    %454 = vmatprep.mubr.bf16.mxu0 0
    %455 = vmatmul.mubr.bf16.gmra.mxu0 %v416
    %v456 = vpop.f32.mrf.mxu0
    %v457 = vadd.f32 0.0, %v456
    %v458 = vpop.f32.mrf.mxu0
    %v459 = vpop.f32.mrf.mxu0
    %v460 = vpop.f32.mrf.mxu0
    %461 = vdwg.mxu0
    %v463 = vsel %vm394, %v414, 0
    %v466 = vsel %vm418, %v313, 0
    %468 = vmatprep.subr.bf16.mxu0 0
    %469 = vmatpush1.bf16.msra.mxu0 0
    %470 = vmatprep.subr.bf16.mxu0 0
    %471 = vmatpush1.bf16.msra.mxu0 0
    %472 = vmatprep.subr.bf16.mxu0 0
    %473 = vmatpush1.bf16.msra.mxu0 0
    %474 = vmatprep.subr.bf16.mxu0 0
    %475 = vmatpush1.bf16.msra.mxu0 0
    %476 = vmatprep.subr.bf16.mxu0 0
    %477 = vmatpush1.bf16.msra.mxu0 0
    %478 = vmatprep.subr.bf16.mxu0 0
    %479 = vmatpush1.bf16.msra.mxu0 0
    %480 = vmatprep.subr.bf16.mxu0 0
    %481 = vmatpush1.bf16.msra.mxu0 0
    %482 = vmatprep.subr.bf16.mxu0 0
    %483 = vmatpush1.bf16.msra.mxu0 %v466
    %484 = vmatprep.subr.bf16.mxu0 0
    %485 = vmatpush2.bf16.msra.mxu0 0
    %486 = vmatprep.subr.bf16.mxu0 0
    %487 = vmatpush2.bf16.msra.mxu0 0
    %488 = vmatprep.subr.bf16.mxu0 0
    %489 = vmatpush2.bf16.msra.mxu0 0
    %490 = vmatprep.subr.bf16.mxu0 0
    %491 = vmatpush2.bf16.msra.mxu0 0
    %492 = vmatprep.subr.bf16.mxu0 0
    %493 = vmatpush2.bf16.msra.mxu0 0
    %494 = vmatprep.subr.bf16.mxu0 0
    %495 = vmatpush2.bf16.msra.mxu0 0
    %496 = vmatprep.subr.bf16.mxu0 0
    %497 = vmatpush2.bf16.msra.mxu0 0
    %498 = vmatprep.subr.bf16.mxu0 0
    %499 = vmatpush2.bf16.msra.mxu0 0
    %500 = vmatprep.mubr.bf16.mxu0 0
    %501 = vmatmul.mubr.bf16.gmra.mxu0 %v463
    %v502 = vpop.f32.mrf.mxu0
    %v503 = vadd.f32 0.0, %v502
    %v504 = vpop.f32.mrf.mxu0
    %v505 = vpop.f32.mrf.mxu0
    %v506 = vpop.f32.mrf.mxu0
    %507 = vdwg.mxu0
    %v508 = vrcp.pop %v409
    %v509 = vrcp.pop %v412
    %v510 = vmul.f32 %v457, %v508
    %v511 = vmul.f32 %v503, %v509
    %v512 = vrot.slane %v510, 4
    %v513 = vadd.f32 %v510, %v512
    %v514 = vrot.slane %v513, 2
    %v515 = vadd.f32 %v513, %v514
    %v516 = vrot.slane %v515, 1
    %v517 = vadd.f32 %v515, %v516
    %v518 = vrot.slane %v511, 4
    %v519 = vadd.f32 %v511, %v518
    %v520 = vrot.slane %v519, 2
    %v521 = vadd.f32 %v519, %v520
    %v522 = vrot.slane %v521, 1
    %v523 = vadd.f32 %v521, %v522
    %v524 = vmul.f32 %v517, 0.125
    %v525 = vmul.f32 %v523, 0.125
    %v526 = vmul.f32 %v44, %v510
    %v527 = vmul.f32 %v45, %v511
    %v528 = vrot.slane %v526, 4
    %v529 = vadd.f32 %v526, %v528
    %v530 = vrot.slane %v529, 2
    %v531 = vadd.f32 %v529, %v530
    %v532 = vrot.slane %v531, 1
    %v533 = vadd.f32 %v531, %v532
    %v534 = vrot.slane %v527, 4
    %v535 = vadd.f32 %v527, %v534
    %v536 = vrot.slane %v535, 2
    %v537 = vadd.f32 %v535, %v536
    %v538 = vrot.slane %v537, 1
    %v539 = vadd.f32 %v537, %v538
    %v540 = vmul.f32 %v524, %v524
    %v541 = vmul.f32 %v525, %v525
    %v542 = vsub.f32 %v533, %v540
    %v543 = vsub.f32 %v539, %v541
    %vm546 = vcmask 1041409
    %v547 = vsel %vm546, %v525, %v524
    %v550 = vsel %vm546, %v543, %v542
    %v551 = vcombine.low %v547, %v550
    %v553 = vunpack.c.l.s4 1983009808
    %v554 = vunpack.c.0.s8 %v553
    %v555 = vlaneseq
    %v556 = vshrl.u32 %v555, 7
    %v557 = vsub.s32 %v554, %v556
    %v558 = vrot.slane %v551, %v557
    %560 = vst [vmem:[#allocation7] sm:$0xf] %v558
    // Predicated region
    $region22: #{tpu_custom_call.1} parent=1 // pred_check
      _
    $region23: #{tpu_custom_call.1} parent=1 // pred_check_branch
      %562 = sbr.rel (0) target = $region25
    $region24: #{tpu_custom_call.1} parent=1 // pred_region
      %s564 = ssub.s32 64, 64
      %565 = vsyncadd [#allocation4], %s564
      %s567 = sshll.u32 [#allocation7], 4
      %s568 = int_to_ptr.vmem [resolvable:$true] %s567
      %570 = dma.vmem_to_hbm [thread:$0]  %s568, 64, %s3, [#allocation4]
    $region25: #{tpu_custom_call.1} parent=1 // pred_fallthru
      _
    // Predicated region
    $region26: #{tpu_custom_call.1} parent=1 // pred_check
      _
    $region27: #{tpu_custom_call.1} parent=1 // pred_check_branch
      %572 = sbr.rel (0) target = $region29
    $region28: #{tpu_custom_call.1} parent=1 // pred_region
      %573 = dma.done [#allocation4], 64
    $region29: #{tpu_custom_call.1} parent=1 // pred_fallthru
      _
    %574 = vsyncpa [#allocation3], 1
    %575 = vsyncpa [#allocation6], 1
    %576 = vsyncpa [#allocation4], 1

</llo_original>
